<compile_context>
chip_gen: v5e
topology: v5e:2x2
jax: 0.10.0
libtpu: 0.0.40
codegen_flags: <defaults>
</compile_context>

<pallas_src>
import numpy as np
import jax
import jax.numpy as jnp
from jax.experimental import pallas as pl
from jax.experimental.pallas import tpu as pltpu


# ----------------------------- host: build the fixed layer unitary -----------
def _ry(theta):
    c, s = np.cos(theta / 2.0), np.sin(theta / 2.0)
    return np.array([[c, -s], [s, c]], dtype=np.complex128)


def _rx(theta):
    c, s = np.cos(theta / 2.0), np.sin(theta / 2.0)
    return np.array([[c, -1j * s], [-1j * s, c]], dtype=np.complex128)


def _gate_full(g2, q, n):
    u = np.array([[1.0 + 0j]], dtype=np.complex128)
    for j in range(n):
        u = np.kron(u, g2 if j == q else np.eye(2, dtype=np.complex128))
    return u


def _cnot_full(ctrl, tgt, n):
    d = 2 ** n
    idx = np.arange(d)
    cbit = (idx >> (n - 1 - ctrl)) & 1
    new_idx = np.where(cbit == 1, idx ^ (1 << (n - 1 - tgt)), idx)
    p = np.zeros((d, d), dtype=np.complex128)
    p[new_idx, idx] = 1.0
    return p


def build_layer_unitary(weights_np, n):
    """Unitary of the trainable part (RX layers + CNOT ring). Wire 0 = MSB."""
    layers = weights_np.shape[0]
    d = 2 ** n
    u = np.eye(d, dtype=np.complex128)
    for i in range(layers):
        for j in range(n):
            u = _gate_full(_rx(weights_np[i, j]), j, n) @ u
        for j in range(n):
            u = _cnot_full(j, (j + 1) % n, n) @ u
    return u


# ----------------------------- Pallas kernel ---------------------------------
def qfe_kernel(xt_ref, bits_ref, ucat_ref, zsign2_ref, out_ref):
    # xt_ref     : (n, tb)       f32  angles, batch on lanes
    # bits_ref   : (d, n)        f32  bit j of basis index k (wire 0 = MSB)
    # ucat_ref   : (2d, d)       f32  [U_re ; U_im] of the trainable unitary
    # zsign2_ref : (n_pad, 2d)   f32  [Zsign | Zsign], zero-padded rows
    # out_ref    : (n_pad, tb)   f32  <Z_i> per batch column
    n, tb = xt_ref.shape
    d = bits_ref.shape[0]

    x = xt_ref[...]
    c = jnp.cos(0.5 * x)                 # RY(theta)|0> = [cos(t/2), sin(t/2)]
    s = jnp.sin(0.5 * x)
    delta = s - c                        # (n, tb)

    # product-state amplitudes: amp[k, b] = prod_j (bit_j(k) ? s[j,b] : c[j,b])
    # per-wire term = c_j + bit_j * (s_j - c_j); combine with a balanced tree
    # (log2(n) rounds) instead of a serial multiply chain.
    terms = []
    for j in range(n):                   # static unroll, n is small
        bit_j = jnp.broadcast_to(bits_ref[:, j:j + 1], (d, tb))   # lane bcast
        term = (jnp.broadcast_to(c[j:j + 1, :], (d, tb))
                + bit_j * jnp.broadcast_to(delta[j:j + 1, :], (d, tb)))
        terms.append(term)
    while len(terms) > 1:
        nxt = [a * b for a, b in zip(terms[0::2], terms[1::2])]
        if len(terms) % 2:
            nxt.append(terms[-1])
        terms = nxt
    amp = terms[0]                                                # (d, tb)

    # psi = U @ amp, real & imag fused into a single f32 MXU call (f32 acc)
    psi = jnp.dot(ucat_ref[...], amp,
                  preferred_element_type=jnp.float32)             # (2d, tb)

    # expval(Z_i) = sum_k zsign[i,k] * (re^2 + im^2) = [Z|Z] @ (psi*psi)
    out_ref[...] = jnp.dot(zsign2_ref[...], psi * psi,
                           preferred_element_type=jnp.float32)    # (n_pad, tb)


# ----------------------------- tiling helpers ---------------------------------
def _num_tensorcores():
    # v7x chips have 2 TensorCores; v5e/v6e have 1 (grid is a serial loop there).
    try:
        kind = (jax.devices()[0].device_kind or "").lower()
        if "v7" in kind or "7x" in kind:
            return 2
    except Exception:
        pass
    return 1


def _tile_batch(b, n, d, n_pad):
    lane = 128
    b_lane = max(lane, -(-b // lane) * lane)

    # per-step VMEM estimate (f32 rows per lane column)
    rows_per_lane = (2 * n            # x tile (double-buffered)
                     + 2 * n_pad      # out tile (double-buffered)
                     + 3 * n          # cos / sin / delta
                     + n * d          # per-wire terms (tree peak)
                     + d              # amp
                     + 4 * d)         # psi and psi*psi
    fixed_bytes = 2 * 4 * (d * n + 2 * d * d + n_pad * 2 * d)  # constants (dbl-buf)
    budget = 20 * 1024 * 1024         # conservative vs. 32 MiB scoped default
    avail = budget - fixed_bytes
    if avail <= rows_per_lane * 4 * lane:
        # TODO(synk): K-tile the (2d, d) unitary contraction for n >~ 11 qubits
        raise ValueError("QFE unitary too large for single-tile VMEM budget")
    tb_max = min(32768, (avail // (rows_per_lane * 4) // lane) * lane)

    n_tc = _num_tensorcores()
    per_core = -(-b_lane // n_tc)
    tb = min(tb_max, max(lane, -(-per_core // lane) * lane))
    n_tiles = -(-b_lane // tb)
    b_pad = n_tiles * tb
    return tb, n_tiles, b_pad


# ----------------------------- wrapper -----------------------------------------
def qfe_forward(x, weights):
    b, n = x.shape
    d = 2 ** n

    # batch-independent trainable unitary (RX layers + CNOT ring), built once
    u = build_layer_unitary(np.asarray(weights, dtype=np.float64), n)
    u_cat = jnp.asarray(np.concatenate([u.real, u.imag], axis=0),
                        dtype=jnp.float32)                         # (2d, d)

    idx = np.arange(d)
    bits_np = np.stack(
        [((idx >> (n - 1 - j)) & 1).astype(np.float32) for j in range(n)],
        axis=1)                                                    # (d, n)
    n_pad = max(8, ((n + 7) // 8) * 8)        # sublane-aligned output rows
    zsign_np = np.zeros((n_pad, d), np.float32)
    zsign_np[:n] = 1.0 - 2.0 * bits_np.T
    zsign2_np = np.concatenate([zsign_np, zsign_np], axis=1)       # (n_pad, 2d)
    bits = jnp.asarray(bits_np)
    zsign2 = jnp.asarray(zsign2_np)

    tb, n_tiles, b_pad = _tile_batch(b, n, d, n_pad)

    x_t = jnp.pad(x.astype(jnp.float32).T, ((0, 0), (0, b_pad - b)))  # (n, b_pad)

    cost = pl.CostEstimate(
        flops=int(b_pad * (2 * (2 * d) * d + 2 * n_pad * (2 * d) + 4 * n * d)),
        transcendentals=int(2 * n * b_pad),
        bytes_accessed=int(4 * ((n + n_pad) * b_pad
                                + d * n + 2 * d * d + n_pad * 2 * d)),
    )

    out = pl.pallas_call(
        qfe_kernel,
        out_shape=jax.ShapeDtypeStruct((n_pad, b_pad), jnp.float32),
        grid_spec=pl.GridSpec(
            grid=(n_tiles,),
            in_specs=[
                pl.BlockSpec((n, tb), lambda i: (0, i)),           # angles
                pl.BlockSpec((d, n), lambda i: (0, 0)),            # bit table
                pl.BlockSpec((2 * d, d), lambda i: (0, 0)),        # [U_re;U_im]
                pl.BlockSpec((n_pad, 2 * d), lambda i: (0, 0)),    # [Z | Z]
            ],
            out_specs=pl.BlockSpec((n_pad, tb), lambda i: (0, i)),
        ),
        compiler_params=pltpu.CompilerParams(
            dimension_semantics=("parallel",)),
        cost_estimate=cost,
    )(x_t, bits, u_cat, zsign2)

    return out[:n, :b].T                                           # (b, n)


# ----------------------------- numpy reference ---------------------------------
def ref_forward(x_np, weights_np, n):
    d = 2 ** n
    outs = []
    for b in range(x_np.shape[0]):
        psi = np.zeros(d, dtype=np.complex128)
        psi[0] = 1.0
        for j in range(n):                                  # AngleEmbedding (RY)
            psi = _gate_full(_ry(x_np[b, j]), j, n) @ psi
        for i in range(weights_np.shape[0]):                # trainable layers
            for j in range(n):
                psi = _gate_full(_rx(weights_np[i, j]), j, n) @ psi
            for j in range(n):
                psi = _cnot_full(j, (j + 1) % n, n) @ psi
        probs = np.abs(psi) ** 2
        exps = []
        for i in range(n):
            sign = 1.0 - 2.0 * ((np.arange(d) >> (n - 1 - i)) & 1)
            exps.append(np.sum(probs * sign))
        outs.append(exps)
    return np.array(outs, dtype=np.float32)


# ----------------------------- main ---------------------------------------------
if __name__ == "__main__":
    features = 4       # n_qubits
    layers = 2
    batch = 2

    key = jax.random.PRNGKey(0)
    kx, kw = jax.random.split(key)
    x = jax.random.uniform(kx, (batch, features), jnp.float32,
                           minval=-np.pi, maxval=np.pi)
    # TorchLayer default-style init: uniform(0, 2*pi)
    weights = jax.random.uniform(kw, (layers, features), jnp.float32,
                                 minval=0.0, maxval=2.0 * np.pi)

    out = qfe_forward(x, weights)
    out = jax.block_until_ready(out)

    ref = ref_forward(np.asarray(x, dtype=np.float64),
                      np.asarray(weights, dtype=np.float64), features)
    np.testing.assert_allclose(np.asarray(out), ref, atol=1e-4, rtol=0)

    print("KERNEL_OK")
</pallas_src>

<mosaic_0001>
module attributes {stable_mosaic.version = 11 : i64} {
  func.func @qfe_kernel(%arg0: i32, %arg1: memref<4x128xf32, #tpu.memory_space<vmem>>, %arg2: memref<16x4xf32, #tpu.memory_space<vmem>>, %arg3: memref<32x16xf32, #tpu.memory_space<vmem>>, %arg4: memref<8x32xf32, #tpu.memory_space<vmem>>, %arg5: memref<8x128xf32, #tpu.memory_space<vmem>>) attributes {dimension_semantics = [#tpu.dimension_semantics<parallel>], iteration_bounds = array<i64: 1>, scalar_prefetch = 0 : i64, scratch_operands = 0 : i64, tpu.core_type = #tpu.core_type<tc>, window_params = [{transform_indices = @transform_0, window_bounds = array<i64: 4, 128>}, {pipeline_mode = #tpu.pipeline_mode<synchronous>, transform_indices = @transform_1, window_bounds = array<i64: 16, 4>}, {pipeline_mode = #tpu.pipeline_mode<synchronous>, transform_indices = @transform_2, window_bounds = array<i64: 32, 16>}, {pipeline_mode = #tpu.pipeline_mode<synchronous>, transform_indices = @transform_3, window_bounds = array<i64: 8, 32>}, {transform_indices = @transform_4, window_bounds = array<i64: 8, 128>}]} {
    %c0 = arith.constant 0 : index
    %c0_0 = arith.constant 0 : index
    %0 = vector.load %arg1[%c0, %c0_0] : memref<4x128xf32, #tpu.memory_space<vmem>>, vector<4x128xf32>
    %cst = arith.constant 5.000000e-01 : f32
    %1 = vector.broadcast %cst : f32 to vector<4x128xf32>
    %2 = arith.mulf %1, %0 : vector<4x128xf32>
    %3 = math.cos %2 : vector<4x128xf32>
    %cst_1 = arith.constant 5.000000e-01 : f32
    %4 = vector.broadcast %cst_1 : f32 to vector<4x128xf32>
    %5 = arith.mulf %4, %0 : vector<4x128xf32>
    %6 = math.sin %5 : vector<4x128xf32>
    %7 = arith.subf %6, %3 : vector<4x128xf32>
    %c0_2 = arith.constant 0 : index
    %c0_3 = arith.constant 0 : index
    %8 = vector.load %arg2[%c0_2, %c0_3] : memref<16x4xf32, #tpu.memory_space<vmem>>, vector<16x1xf32>
    %9 = vector.shape_cast %8 : vector<16x1xf32> to vector<16x1xf32>
    %10 = vector.broadcast %9 : vector<16x1xf32> to vector<16x128xf32>
    %11 = vector.extract_strided_slice %3 {offsets = [0, 0], sizes = [1, 128], strides = [1, 1]} : vector<4x128xf32> to vector<1x128xf32>
    %12 = vector.shape_cast %11 : vector<1x128xf32> to vector<1x128xf32>
    %13 = vector.broadcast %12 : vector<1x128xf32> to vector<16x128xf32>
    %14 = vector.extract_strided_slice %7 {offsets = [0, 0], sizes = [1, 128], strides = [1, 1]} : vector<4x128xf32> to vector<1x128xf32>
    %15 = vector.shape_cast %14 : vector<1x128xf32> to vector<1x128xf32>
    %16 = vector.broadcast %15 : vector<1x128xf32> to vector<16x128xf32>
    %17 = arith.mulf %10, %16 : vector<16x128xf32>
    %18 = arith.addf %13, %17 : vector<16x128xf32>
    %c0_4 = arith.constant 0 : index
    %c1 = arith.constant 1 : index
    %19 = vector.load %arg2[%c0_4, %c1] : memref<16x4xf32, #tpu.memory_space<vmem>>, vector<16x1xf32>
    %20 = vector.shape_cast %19 : vector<16x1xf32> to vector<16x1xf32>
    %21 = vector.broadcast %20 : vector<16x1xf32> to vector<16x128xf32>
    %22 = vector.extract_strided_slice %3 {offsets = [1, 0], sizes = [1, 128], strides = [1, 1]} : vector<4x128xf32> to vector<1x128xf32>
    %23 = vector.shape_cast %22 : vector<1x128xf32> to vector<1x128xf32>
    %24 = vector.broadcast %23 : vector<1x128xf32> to vector<16x128xf32>
    %25 = vector.extract_strided_slice %7 {offsets = [1, 0], sizes = [1, 128], strides = [1, 1]} : vector<4x128xf32> to vector<1x128xf32>
    %26 = vector.shape_cast %25 : vector<1x128xf32> to vector<1x128xf32>
    %27 = vector.broadcast %26 : vector<1x128xf32> to vector<16x128xf32>
    %28 = arith.mulf %21, %27 : vector<16x128xf32>
    %29 = arith.addf %24, %28 : vector<16x128xf32>
    %c0_5 = arith.constant 0 : index
    %c2 = arith.constant 2 : index
    %30 = vector.load %arg2[%c0_5, %c2] : memref<16x4xf32, #tpu.memory_space<vmem>>, vector<16x1xf32>
    %31 = vector.shape_cast %30 : vector<16x1xf32> to vector<16x1xf32>
    %32 = vector.broadcast %31 : vector<16x1xf32> to vector<16x128xf32>
    %33 = vector.extract_strided_slice %3 {offsets = [2, 0], sizes = [1, 128], strides = [1, 1]} : vector<4x128xf32> to vector<1x128xf32>
    %34 = vector.shape_cast %33 : vector<1x128xf32> to vector<1x128xf32>
    %35 = vector.broadcast %34 : vector<1x128xf32> to vector<16x128xf32>
    %36 = vector.extract_strided_slice %7 {offsets = [2, 0], sizes = [1, 128], strides = [1, 1]} : vector<4x128xf32> to vector<1x128xf32>
    %37 = vector.shape_cast %36 : vector<1x128xf32> to vector<1x128xf32>
    %38 = vector.broadcast %37 : vector<1x128xf32> to vector<16x128xf32>
    %39 = arith.mulf %32, %38 : vector<16x128xf32>
    %40 = arith.addf %35, %39 : vector<16x128xf32>
    %c0_6 = arith.constant 0 : index
    %c3 = arith.constant 3 : index
    %41 = vector.load %arg2[%c0_6, %c3] : memref<16x4xf32, #tpu.memory_space<vmem>>, vector<16x1xf32>
    %42 = vector.shape_cast %41 : vector<16x1xf32> to vector<16x1xf32>
    %43 = vector.broadcast %42 : vector<16x1xf32> to vector<16x128xf32>
    %44 = vector.extract_strided_slice %3 {offsets = [3, 0], sizes = [1, 128], strides = [1, 1]} : vector<4x128xf32> to vector<1x128xf32>
    %45 = vector.shape_cast %44 : vector<1x128xf32> to vector<1x128xf32>
    %46 = vector.broadcast %45 : vector<1x128xf32> to vector<16x128xf32>
    %47 = vector.extract_strided_slice %7 {offsets = [3, 0], sizes = [1, 128], strides = [1, 1]} : vector<4x128xf32> to vector<1x128xf32>
    %48 = vector.shape_cast %47 : vector<1x128xf32> to vector<1x128xf32>
    %49 = vector.broadcast %48 : vector<1x128xf32> to vector<16x128xf32>
    %50 = arith.mulf %43, %49 : vector<16x128xf32>
    %51 = arith.addf %46, %50 : vector<16x128xf32>
    %52 = arith.mulf %18, %29 : vector<16x128xf32>
    %53 = arith.mulf %40, %51 : vector<16x128xf32>
    %54 = arith.mulf %52, %53 : vector<16x128xf32>
    %c0_7 = arith.constant 0 : index
    %c0_8 = arith.constant 0 : index
    %55 = vector.load %arg3[%c0_7, %c0_8] : memref<32x16xf32, #tpu.memory_space<vmem>>, vector<32x16xf32>
    %cst_9 = arith.constant dense<0.000000e+00> : vector<32x128xf32>
    %56 = tpu.matmul %55, %54, %cst_9 {dimension_numbers = #tpu.dot_dimension_numbers<[1], [0], [0], [1], [0, 0, 1, 1], [], []>} : vector<32x16xf32>, vector<16x128xf32>, vector<32x128xf32> -> vector<32x128xf32>
    %c0_10 = arith.constant 0 : index
    %c0_11 = arith.constant 0 : index
    %57 = vector.load %arg4[%c0_10, %c0_11] : memref<8x32xf32, #tpu.memory_space<vmem>>, vector<8x32xf32>
    %58 = arith.mulf %56, %56 : vector<32x128xf32>
    %cst_12 = arith.constant dense<0.000000e+00> : vector<8x128xf32>
    %59 = tpu.matmul %57, %58, %cst_12 {dimension_numbers = #tpu.dot_dimension_numbers<[1], [0], [0], [1], [0, 0, 1, 1], [], []>} : vector<8x32xf32>, vector<32x128xf32>, vector<8x128xf32> -> vector<8x128xf32>
    %c0_13 = arith.constant 0 : index
    %c0_14 = arith.constant 0 : index
    %60 = vector.load %arg5[%c0_13, %c0_14] : memref<8x128xf32, #tpu.memory_space<vmem>>, vector<8x128xf32>
    tpu.vector_store %arg5[%c0_13, %c0_14], %59 {strides = array<i32>} : memref<8x128xf32, #tpu.memory_space<vmem>>, vector<8x128xf32>,
    return
  }
  func.func @transform_0(%arg0: i32) -> (i32, i32) {
    %c0_i32 = arith.constant 0 : i32
    %c0_i32_0 = arith.constant 0 : i32
    return %c0_i32, %arg0 : i32, i32
  }
  func.func @transform_1(%arg0: i32) -> (i32, i32) {
    %c0_i32 = arith.constant 0 : i32
    %c0_i32_0 = arith.constant 0 : i32
    %c0_i32_1 = arith.constant 0 : i32
    return %c0_i32, %c0_i32_0 : i32, i32
  }
  func.func @transform_2(%arg0: i32) -> (i32, i32) {
    %c0_i32 = arith.constant 0 : i32
    %c0_i32_0 = arith.constant 0 : i32
    %c0_i32_1 = arith.constant 0 : i32
    return %c0_i32, %c0_i32_0 : i32, i32
  }
  func.func @transform_3(%arg0: i32) -> (i32, i32) {
    %c0_i32 = arith.constant 0 : i32
    %c0_i32_0 = arith.constant 0 : i32
    %c0_i32_1 = arith.constant 0 : i32
    return %c0_i32, %c0_i32_0 : i32, i32
  }
  func.func @transform_4(%arg0: i32) -> (i32, i32) {
    %c0_i32 = arith.constant 0 : i32
    %c0_i32_0 = arith.constant 0 : i32
    return %c0_i32, %arg0 : i32, i32
  }
}

</mosaic_0001>

<llo_original>
// kernel: tpu_custom_call.1
$region0: #{tpu_custom_call.1}
  #allocation0 [shape = 'u32[]', space=smem, size = 0x4, offset = 0x4, fixed_abs, tag = 'smem constant byte address 0x4 - core index']
  #allocation1 [shape = 'u32[72,128]{1,0:T(1,128)}', space=vmem, size = 0x9000, scoped, tag = 'internal scratch']
  %s0 = inlined_call_operand.vmem [shape: f32[4,128], index: 0, kind: input, shape index: {}]
  %s1 = inlined_call_operand.vmem [shape: f32[16,4], index: 1, kind: input, shape index: {}]
  %s2 = inlined_call_operand.vmem [shape: f32[32,16], index: 2, kind: input, shape index: {}]
  %s3 = inlined_call_operand.vmem [shape: f32[8,32], index: 3, kind: input, shape index: {}]
  %s4 = inlined_call_operand.hbm [shape: f32[8,128], index: 4, kind: output, shape index: {}]
  %s5 = sld [smem:[#allocation0]]
  $region26: #{tpu_custom_call.1} parent=0
    _
  %s7 = ssub.s32 1, %s5
  %s8 = scalar_select 0, %s7, %s5
  $region1: #{tpu_custom_call.1} parent=0
    #allocation2 [shape = 'u8[4096]{0}', space=vmem, size = 0x1000, scoped, tag = 'output window, operand 0, single buffered']
    #allocation3 [shape = 's32[1]{0}', space=sflag, size = 0x4, scoped, tag = 'scoped memory for tpu_custom_call.1']
    %9 = vsyncpa [#allocation3], 0
    // Predicated region
    $region2: #{tpu_custom_call.1} parent=1 // pred_check
      _
    $region3: #{tpu_custom_call.1} parent=1 // pred_check_branch
      %11 = sbr.rel (0) target = $region5
    $region4: #{tpu_custom_call.1} parent=1 // pred_region
      _
    $region5: #{tpu_custom_call.1} parent=1 // pred_fallthru
      _
    // Predicated region
    $region6: #{tpu_custom_call.1} parent=1 // pred_check
      _
    $region7: #{tpu_custom_call.1} parent=1 // pred_check_branch
      %13 = sbr.rel (0) target = $region9
    $region8: #{tpu_custom_call.1} parent=1 // pred_region
      _
    $region9: #{tpu_custom_call.1} parent=1 // pred_fallthru
      _
    // Predicated region
    $region10: #{tpu_custom_call.1} parent=1 // pred_check
      _
    $region11: #{tpu_custom_call.1} parent=1 // pred_check_branch
      %15 = sbr.rel (0) target = $region13
    $region12: #{tpu_custom_call.1} parent=1 // pred_region
      _
    $region13: #{tpu_custom_call.1} parent=1 // pred_fallthru
      _
    // Predicated region
    $region14: #{tpu_custom_call.1} parent=1 // pred_check
      _
    $region15: #{tpu_custom_call.1} parent=1 // pred_check_branch
      %17 = sbr.rel (0) target = $region17
    $region16: #{tpu_custom_call.1} parent=1 // pred_region
      _
    $region17: #{tpu_custom_call.1} parent=1 // pred_fallthru
      _
    %v18 = vld [vmem:[%s0] sm:$0xf]
    %v19 = vmul.f32 %v18, 0.5
    %v20 = vand.u32 2147483647, %v19
    %vm21 = vcmp.le.f32.partialorder %v20, 0.7853982
    %vm22 = vcmp.lt.s32.totalorder %v19, 0
    %v23 = vand.u32 %v19, 2139095040
    %v24 = vshrl.u32 %v23, 23
    %v25 = vsub.s32 %v24, 127
    %v26 = vand.u32 2147483647, %v19
    %v27 = vand.u32 %v26, 8388607
    %v28 = vor.u32 %v27, 8388608
    %v29 = vsub.s32 0, %v28
    %v30 = vadd.s32 %v25, 1
    %vm31 = vcmp.gt.s32.totalorder %v30, 0
    %v32 = vsel %vm31, %v30, 0
    %v33 = vshrl.u32 %v32, 5
    %v34 = vand.u32 %v32, 31
    %v35 = vsub.s32 32, %v34
    %v36 = vshrl.u32 683565275, %v35
    %v37 = vshll.u32 683565275, %v34
    %v38 = vshrl.u32 2475754826, %v35
    %v39 = vor.u32 %v37, %v38
    %v40 = vshll.u32 2475754826, %v34
    %v41 = vshrl.u32 2131351028, %v35
    %v42 = vor.u32 %v40, %v41
    %v43 = vshll.u32 2131351028, %v34
    %v44 = vshrl.u32 2102212464, %v35
    %v45 = vor.u32 %v43, %v44
    %v46 = vshll.u32 2102212464, %v34
    %v47 = vshrl.u32 920167782, %v35
    %v48 = vor.u32 %v46, %v47
    %v49 = vshll.u32 920167782, %v34
    %v50 = vshrl.u32 1326507024, %v35
    %v51 = vor.u32 %v49, %v50
    %vm52 = vcmp.lt.s32.totalorder %v33, 1
    %vm53 = vcmp.lt.s32.totalorder %v33, 2
    %vm54 = vcmp.lt.s32.totalorder %v33, 3
    %vm55 = vcmp.lt.s32.totalorder %v33, 4
    %v56 = vsel %vm52, %v36, %v39
    %v57 = vsel %vm55, %v45, 2102212464
    %v58 = vsel %vm54, %v42, %v57
    %v59 = vsel %vm53, %v56, %v58
    %v60 = vsel %vm52, %v39, %v42
    %v61 = vsel %vm55, %v48, 920167782
    %v62 = vsel %vm54, %v45, %v61
    %v63 = vsel %vm53, %v60, %v62
    %v64 = vsel %vm52, %v42, %v45
    %v65 = vsel %vm55, %v51, 1326507024
    %v66 = vsel %vm54, %v48, %v65
    %v67 = vsel %vm53, %v64, %v66
    %v68 = vshll.u32 %v28, 8
    %v69 = vand.u32 %v68, 65535
    %v70 = vshrl.u32 %v68, 16
    %v71 = vand.u32 %v67, 65535
    %v72 = vshrl.u32 %v67, 16
    %v73 = vmul.u32 %v69, %v71
    %v74 = vmul.u32 %v69, %v72
    %v75 = vmul.u32 %v70, %v71
    %v76 = vmul.u32 %v70, %v72
    %v77 = vshll.u32 %v74, 16
    %v78 = vshrl.u32 %v74, 16
    %v79 = vshll.u32 %v75, 16
    %v80 = vshrl.u32 %v75, 16
    %vm81 = vc.u32 %v73, %v77
    %v82 = vsel %vm81, 1, 0
    %v83 = vadd.s32 %v73, %v77
    %v84 = vadd.s32 %v76, %v82
    %vm85 = vc.u32 %v83, %v79
    %v86 = vsel %vm85, 1, 0
    %v87 = vadd.s32 %v83, %v79
    %v88 = vadd.s32 %v84, %v86
    %v89 = vadd.s32 %v88, %v78
    %v90 = vadd.s32 %v89, %v80
    %v91 = vand.u32 %v68, 65535
    %v92 = vshrl.u32 %v68, 16
    %v93 = vand.u32 %v63, 65535
    %v94 = vshrl.u32 %v63, 16
    %v95 = vmul.u32 %v91, %v93
    %v96 = vmul.u32 %v91, %v94
    %v97 = vmul.u32 %v92, %v93
    %v98 = vmul.u32 %v92, %v94
    %v99 = vshll.u32 %v96, 16
    %v100 = vshrl.u32 %v96, 16
    %v101 = vshll.u32 %v97, 16
    %v102 = vshrl.u32 %v97, 16
    %vm103 = vc.u32 %v95, %v99
    %v104 = vsel %vm103, 1, 0
    %v105 = vadd.s32 %v95, %v99
    %v106 = vadd.s32 %v98, %v104
    %vm107 = vc.u32 %v105, %v101
    %v108 = vsel %vm107, 1, 0
    %v109 = vadd.s32 %v105, %v101
    %v110 = vadd.s32 %v106, %v108
    %v111 = vadd.s32 %v110, %v100
    %v112 = vadd.s32 %v111, %v102
    %v113 = vmul.u32 %v68, %v59
    %v114 = vadd.s32 %v90, %v109
    %vm115 = vc.u32 %v90, %v109
    %v116 = vadd.s32 %v112, 1
    %v117 = vsel %vm115, %v116, %v112
    %v118 = vadd.s32 %v113, %v117
    %v119 = vadd.s32 %v118, 536870912
    %v120 = vshrl.u32 %v119, 30
    %v121 = vshll.u32 %v120, 30
    %v122 = vsub.s32 %v118, %v121
    %vm123 = vcmp.lt.s32.totalorder %v122, 0
    %v124 = vsub.s32 0, %v122
    %v125 = vsel %vm123, %v124, %v122
    %v126 = vclz %v125
    %v127 = vsub.s32 %v126, 2
    %vm128 = vcmp.gt.s32.totalorder 0, %v127
    %v129 = vsel %vm128, 0, %v127
    %v130 = vsub.s32 32, %v129
    %v131 = vshll.u32 %v122, %v129
    %v132 = vshrl.u32 %v114, %v130
    %v133 = vor.u32 %v131, %v132
    %v134 = vsub.s32 4294967266, %v129
    %v135 = vadd.s32 %v134, 127
    %v136 = vshll.u32 %v135, 23
    %v137 = vor.u32 4788187, %v136
    %v138 = vand.u32 2147483647, %v137
    %v140 = vcvt.s32.f32 %v133
    %v141 = vmul.f32 %v140, %v138
    %v142 = vxor.u32 %v141, 2147483648
    %v143 = vsel %vm22, %v142, %v141
    %v144 = vsub.s32 4, %v120
    %v145 = vsel %vm22, %v144, %v120
    %v146 = vsel %vm21, %v19, %v143
    %v147 = vsel %vm21, 0, %v145
    %v148 = vmul.f32 %v146, %v146
    %v149 = vmul.f32 %v148, -0.001358992
    %v150 = vadd.f32 %v149, 0.041655596
    %v151 = vmul.f32 %v148, %v150
    %v152 = vadd.f32 %v151, -0.4999988
    %v153 = vmul.f32 %v148, %v152
    %v154 = vadd.f32 1.0, %v153
    %v155 = vmul.f32 %v146, %v146
    %v156 = vmul.f32 %v155, -0.00019511016
    %v157 = vadd.f32 %v156, 0.008332121
    %v158 = vmul.f32 %v155, %v157
    %v159 = vadd.f32 %v158, -0.16666654
    %v160 = vmul.f32 %v155, %v159
    %v161 = vadd.f32 %v160, 1.0
    %v162 = vmul.f32 %v161, %v146
    %vm163 = vweird.f32 %v19
    %v164 = vand.u32 %v147, 3
    %vm165 = vcmp.lt.s32.totalorder %v164, 2
    %vm166 = vcmp.eq.s32.totalorder %v164, 0
    %v167 = vxor.u32 %v162, 2147483648
    %v168 = vsel %vm166, %v154, %v167
    %vm169 = vcmp.eq.s32.totalorder %v164, 2
    %v170 = vxor.u32 %v154, 2147483648
    %v171 = vsel %vm169, %v170, %v162
    %v172 = vsel %vm165, %v168, %v171
    %v173 = vsel %vm163, nan, %v172
    %v174 = vand.u32 2147483647, %v19
    %vm175 = vcmp.le.f32.partialorder %v174, 0.7853982
    %vm176 = vcmp.lt.s32.totalorder %v19, 0
    %v177 = vand.u32 %v19, 2139095040
    %v178 = vshrl.u32 %v177, 23
    %v179 = vsub.s32 %v178, 127
    %v180 = vand.u32 2147483647, %v19
    %v181 = vand.u32 %v180, 8388607
    %v182 = vor.u32 %v181, 8388608
    %v183 = vsub.s32 0, %v182
    %v184 = vadd.s32 %v179, 1
    %vm185 = vcmp.gt.s32.totalorder %v184, 0
    %v186 = vsel %vm185, %v184, 0
    %v187 = vshrl.u32 %v186, 5
    %v188 = vand.u32 %v186, 31
    %v189 = vsub.s32 32, %v188
    %v190 = vshrl.u32 683565275, %v189
    %v191 = vshll.u32 683565275, %v188
    %v192 = vshrl.u32 2475754826, %v189
    %v193 = vor.u32 %v191, %v192
    %v194 = vshll.u32 2475754826, %v188
    %v195 = vshrl.u32 2131351028, %v189
    %v196 = vor.u32 %v194, %v195
    %v197 = vshll.u32 2131351028, %v188
    %v198 = vshrl.u32 2102212464, %v189
    %v199 = vor.u32 %v197, %v198
    %v200 = vshll.u32 2102212464, %v188
    %v201 = vshrl.u32 920167782, %v189
    %v202 = vor.u32 %v200, %v201
    %v203 = vshll.u32 920167782, %v188
    %v204 = vshrl.u32 1326507024, %v189
    %v205 = vor.u32 %v203, %v204
    %vm206 = vcmp.lt.s32.totalorder %v187, 1
    %vm207 = vcmp.lt.s32.totalorder %v187, 2
    %vm208 = vcmp.lt.s32.totalorder %v187, 3
    %vm209 = vcmp.lt.s32.totalorder %v187, 4
    %v210 = vsel %vm206, %v190, %v193
    %v211 = vsel %vm209, %v199, 2102212464
    %v212 = vsel %vm208, %v196, %v211
    %v213 = vsel %vm207, %v210, %v212
    %v214 = vsel %vm206, %v193, %v196
    %v215 = vsel %vm209, %v202, 920167782
    %v216 = vsel %vm208, %v199, %v215
    %v217 = vsel %vm207, %v214, %v216
    %v218 = vsel %vm206, %v196, %v199
    %v219 = vsel %vm209, %v205, 1326507024
    %v220 = vsel %vm208, %v202, %v219
    %v221 = vsel %vm207, %v218, %v220
    %v222 = vshll.u32 %v182, 8
    %v223 = vand.u32 %v222, 65535
    %v224 = vshrl.u32 %v222, 16
    %v225 = vand.u32 %v221, 65535
    %v226 = vshrl.u32 %v221, 16
    %v227 = vmul.u32 %v223, %v225
    %v228 = vmul.u32 %v223, %v226
    %v229 = vmul.u32 %v224, %v225
    %v230 = vmul.u32 %v224, %v226
    %v231 = vshll.u32 %v228, 16
    %v232 = vshrl.u32 %v228, 16
    %v233 = vshll.u32 %v229, 16
    %v234 = vshrl.u32 %v229, 16
    %vm235 = vc.u32 %v227, %v231
    %v236 = vsel %vm235, 1, 0
    %v237 = vadd.s32 %v227, %v231
    %v238 = vadd.s32 %v230, %v236
    %vm239 = vc.u32 %v237, %v233
    %v240 = vsel %vm239, 1, 0
    %v241 = vadd.s32 %v237, %v233
    %v242 = vadd.s32 %v238, %v240
    %v243 = vadd.s32 %v242, %v232
    %v244 = vadd.s32 %v243, %v234
    %v245 = vand.u32 %v222, 65535
    %v246 = vshrl.u32 %v222, 16
    %v247 = vand.u32 %v217, 65535
    %v248 = vshrl.u32 %v217, 16
    %v249 = vmul.u32 %v245, %v247
    %v250 = vmul.u32 %v245, %v248
    %v251 = vmul.u32 %v246, %v247
    %v252 = vmul.u32 %v246, %v248
    %v253 = vshll.u32 %v250, 16
    %v254 = vshrl.u32 %v250, 16
    %v255 = vshll.u32 %v251, 16
    %v256 = vshrl.u32 %v251, 16
    %vm257 = vc.u32 %v249, %v253
    %v258 = vsel %vm257, 1, 0
    %v259 = vadd.s32 %v249, %v253
    %v260 = vadd.s32 %v252, %v258
    %vm261 = vc.u32 %v259, %v255
    %v262 = vsel %vm261, 1, 0
    %v263 = vadd.s32 %v259, %v255
    %v264 = vadd.s32 %v260, %v262
    %v265 = vadd.s32 %v264, %v254
    %v266 = vadd.s32 %v265, %v256
    %v267 = vmul.u32 %v222, %v213
    %v268 = vadd.s32 %v244, %v263
    %vm269 = vc.u32 %v244, %v263
    %v270 = vadd.s32 %v266, 1
    %v271 = vsel %vm269, %v270, %v266
    %v272 = vadd.s32 %v267, %v271
    %v273 = vadd.s32 %v272, 536870912
    %v274 = vshrl.u32 %v273, 30
    %v275 = vshll.u32 %v274, 30
    %v276 = vsub.s32 %v272, %v275
    %vm277 = vcmp.lt.s32.totalorder %v276, 0
    %v278 = vsub.s32 0, %v276
    %v279 = vsel %vm277, %v278, %v276
    %v280 = vclz %v279
    %v281 = vsub.s32 %v280, 2
    %vm282 = vcmp.gt.s32.totalorder 0, %v281
    %v283 = vsel %vm282, 0, %v281
    %v284 = vsub.s32 32, %v283
    %v285 = vshll.u32 %v276, %v283
    %v286 = vshrl.u32 %v268, %v284
    %v287 = vor.u32 %v285, %v286
    %v288 = vsub.s32 4294967266, %v283
    %v289 = vadd.s32 %v288, 127
    %v290 = vshll.u32 %v289, 23
    %v291 = vor.u32 4788187, %v290
    %v292 = vand.u32 2147483647, %v291
    %v294 = vcvt.s32.f32 %v287
    %v295 = vmul.f32 %v294, %v292
    %v296 = vxor.u32 %v295, 2147483648
    %v297 = vsel %vm176, %v296, %v295
    %v298 = vsub.s32 4, %v274
    %v299 = vsel %vm176, %v298, %v274
    %v300 = vsel %vm175, %v19, %v297
    %v301 = vsel %vm175, 0, %v299
    %v302 = vmul.f32 %v300, %v300
    %v303 = vmul.f32 %v302, -0.001358992
    %v304 = vadd.f32 %v303, 0.041655596
    %v305 = vmul.f32 %v302, %v304
    %v306 = vadd.f32 %v305, -0.4999988
    %v307 = vmul.f32 %v302, %v306
    %v308 = vadd.f32 1.0, %v307
    %v309 = vmul.f32 %v300, %v300
    %v310 = vmul.f32 %v309, -0.00019511016
    %v311 = vadd.f32 %v310, 0.008332121
    %v312 = vmul.f32 %v309, %v311
    %v313 = vadd.f32 %v312, -0.16666654
    %v314 = vmul.f32 %v309, %v313
    %v315 = vadd.f32 %v314, 1.0
    %v316 = vmul.f32 %v315, %v300
    %vm317 = vweird.f32 %v19
    %v318 = vadd.s32 %v301, 3
    %v319 = vand.u32 %v318, 3
    %vm320 = vcmp.lt.s32.totalorder %v319, 2
    %vm321 = vcmp.eq.s32.totalorder %v319, 0
    %v322 = vxor.u32 %v316, 2147483648
    %v323 = vsel %vm321, %v308, %v322
    %vm324 = vcmp.eq.s32.totalorder %v319, 2
    %v325 = vxor.u32 %v308, 2147483648
    %v326 = vsel %vm324, %v325, %v316
    %v327 = vsel %vm320, %v323, %v326
    %v328 = vsel %vm317, nan, %v327
    %v329 = vsub.f32 %v328, %v173
    %v330 = vld [vmem:[%s1] sm:$0xff]
    %v331 = vld [vmem:[%s1 + $0x8] sm:$0xff]
    %333 = vset.pattern.permute.xlu0 0
    %334 = vperm.xlu0 %333, %v330
    %v335 = vpop.permute.xlu0 %334
    %338 = vset.pattern.permute.xlu0 0
    %339 = vperm.xlu0 %338, %v331
    %v340 = vpop.permute.xlu0 %339
    %v342 = vperm.slane %v173, 0
    %v343 = vperm.slane %v329, 0
    %v344 = vmul.f32 %v335, %v343
    %v345 = vmul.f32 %v340, %v343
    %v346 = vadd.f32 %v342, %v344
    %v347 = vadd.f32 %v342, %v345
    %348 = vset.pattern.permute.xlu0 1
    %349 = vperm.xlu0 %348, %v330
    %v350 = vpop.permute.xlu0 %349
    %352 = vset.pattern.permute.xlu0 1
    %353 = vperm.xlu0 %352, %v331
    %v354 = vpop.permute.xlu0 %353
    %v356 = vperm.slane %v173, 1
    %v357 = vperm.slane %v329, 1
    %v358 = vmul.f32 %v350, %v357
    %v359 = vmul.f32 %v354, %v357
    %v360 = vadd.f32 %v356, %v358
    %v361 = vadd.f32 %v356, %v359
    %362 = vset.pattern.permute.xlu0 2
    %363 = vperm.xlu0 %362, %v330
    %v364 = vpop.permute.xlu0 %363
    %366 = vset.pattern.permute.xlu0 2
    %367 = vperm.xlu0 %366, %v331
    %v368 = vpop.permute.xlu0 %367
    %v370 = vperm.slane %v173, 2
    %v371 = vperm.slane %v329, 2
    %v372 = vmul.f32 %v364, %v371
    %v373 = vmul.f32 %v368, %v371
    %v374 = vadd.f32 %v370, %v372
    %v375 = vadd.f32 %v370, %v373
    %376 = vset.pattern.permute.xlu0 3
    %377 = vperm.xlu0 %376, %v330
    %v378 = vpop.permute.xlu0 %377
    %380 = vset.pattern.permute.xlu0 3
    %381 = vperm.xlu0 %380, %v331
    %v382 = vpop.permute.xlu0 %381
    %v384 = vperm.slane %v173, 3
    %v385 = vperm.slane %v329, 3
    %v386 = vmul.f32 %v378, %v385
    %v387 = vmul.f32 %v382, %v385
    %v388 = vadd.f32 %v384, %v386
    %v389 = vadd.f32 %v384, %v387
    %v390 = vmul.f32 %v346, %v360
    %v391 = vmul.f32 %v347, %v361
    %v392 = vmul.f32 %v374, %v388
    %v393 = vmul.f32 %v375, %v389
    %v394 = vmul.f32 %v390, %v392
    %v395 = vmul.f32 %v391, %v393
    %v396 = vld [vmem:[%s2] sm:$0xff]
    %v397 = vld [vmem:[%s2 + $0x8] sm:$0xff]
    %v398 = vld [vmem:[%s2 + $0x10] sm:$0xff]
    %v399 = vld [vmem:[%s2 + $0x18] sm:$0xff]
    %vm400 = vcmask 130048
    %v402 = vsel %vm400, %v396, 0
    %v405 = vsel %vm400, %v397, 0
    %v408 = vsel %vm400, %v398, 0
    %v411 = vsel %vm400, %v399, 0
    %413 = vmatpush.msra.mxu0 0.0
    %414 = vmatpush.msra.mxu0 0.0
    %415 = vmatpush.msra.mxu0 0.0
    %416 = vmatpush.msra.mxu0 0.0
    %417 = vmatpush.msra.mxu0 0.0
    %418 = vmatpush.msra.mxu0 0.0
    %419 = vmatpush.msra.mxu0 0.0
    %420 = vmatpush.msra.mxu0 0.0
    %421 = vmatpush.msra.mxu0 0.0
    %422 = vmatpush.msra.mxu0 0.0
    %423 = vmatpush.msra.mxu0 0.0
    %424 = vmatpush.msra.mxu0 0.0
    %425 = vmatpush.msra.mxu0 0.0
    %426 = vmatpush.msra.mxu0 0.0
    %427 = vmatpush.msra.mxu0 %v395
    %428 = vmatpush.msra.mxu0 %v394
    %429 = vmatmul.f32.gmra.mxu0 %v402
    %v430 = vpop.f32.mrf.mxu0
    %v431 = vadd.f32 0.0, %v430
    %432 = vmatmul.f32.gmra.mxu0 %v405
    %v433 = vpop.f32.mrf.mxu0
    %v434 = vadd.f32 0.0, %v433
    %435 = vmatmul.f32.gmra.mxu0 %v408
    %v436 = vpop.f32.mrf.mxu0
    %v437 = vadd.f32 0.0, %v436
    %438 = vmatmul.f32.gmra.mxu0 %v411
    %v439 = vpop.f32.mrf.mxu0
    %v440 = vadd.f32 0.0, %v439
    %441 = vdwg.mxu0
    %v442 = vld [vmem:[%s3] sm:$0xff]
    %v443 = vmul.f32 %v431, %v431
    %v444 = vmul.f32 %v434, %v434
    %v445 = vmul.f32 %v437, %v437
    %v446 = vmul.f32 %v440, %v440
    %vm447 = vcmask 261120
    %v449 = vsel %vm447, %v442, 0
    %451 = vmatpush.msra.mxu0 0.0
    %452 = vmatpush.msra.mxu0 0.0
    %453 = vmatpush.msra.mxu0 0.0
    %454 = vmatpush.msra.mxu0 0.0
    %455 = vmatpush.msra.mxu0 0.0
    %456 = vmatpush.msra.mxu0 0.0
    %457 = vmatpush.msra.mxu0 0.0
    %458 = vmatpush.msra.mxu0 0.0
    %459 = vmatpush.msra.mxu0 0.0
    %460 = vmatpush.msra.mxu0 0.0
    %461 = vmatpush.msra.mxu0 0.0
    %462 = vmatpush.msra.mxu0 0.0
    %463 = vmatpush.msra.mxu0 %v446
    %464 = vmatpush.msra.mxu0 %v445
    %465 = vmatpush.msra.mxu0 %v444
    %466 = vmatpush.msra.mxu0 %v443
    %467 = vmatmul.f32.gmra.mxu0 %v449
    %v468 = vpop.f32.mrf.mxu0
    %v469 = vadd.f32 0.0, %v468
    %470 = vdwg.mxu0
    %471 = vst [vmem:[#allocation2] sm:$0xff] %v469
    // Predicated region
    $region18: #{tpu_custom_call.1} parent=1 // pred_check
      _
    $region19: #{tpu_custom_call.1} parent=1 // pred_check_branch
      %473 = sbr.rel (0) target = $region21
    $region20: #{tpu_custom_call.1} parent=1 // pred_region
      %475 = vsyncadd [#allocation3], 0
      %s477 = sshll.u32 [#allocation2], 4
      %s478 = int_to_ptr.vmem [resolvable:$true] %s477
      %s479 = sshll.u32 %s4, 4
      %s480 = int_to_ptr.hbm [resolvable:$true] %s479
      %482 = dma.vmem_to_hbm [thread:$0]  %s478, 128, %s480, [#allocation3]
    $region21: #{tpu_custom_call.1} parent=1 // pred_fallthru
      _
    // Predicated region
    $region22: #{tpu_custom_call.1} parent=1 // pred_check
      _
    $region23: #{tpu_custom_call.1} parent=1 // pred_check_branch
      %484 = sbr.rel (0) target = $region25
    $region24: #{tpu_custom_call.1} parent=1 // pred_region
      %486 = dma.done [#allocation3], 128
    $region25: #{tpu_custom_call.1} parent=1 // pred_fallthru
      _
    %487 = vsyncpa [#allocation3], 1

</llo_original>
